<compile_context>
chip_gen: v7x
topology: tpu7x:2x2x1
jax: 0.10.0
libtpu: 0.0.40
codegen_flags: <defaults>
</compile_context>

<pallas_src>
import functools

import jax
import jax.numpy as jnp
from jax import lax
from jax.experimental import pallas as pl
from jax.experimental.pallas import tpu as pltpu


# --------------------------------------------------------------------------
# Tiling helpers
# --------------------------------------------------------------------------
def _largest_aligned_tile(n, target, align):
    """Largest tile <= target that divides n and is a multiple of `align`.
    Falls back to the full dimension, which is always a legal block."""
    if n <= target:
        return n
    t = (min(target, n) // align) * align
    while t >= align:
        if n % t == 0:
            return t
        t -= align
    return n


def _largest_divisor(n, target):
    t = min(n, target)
    while t > 1:
        if n % t == 0:
            return t
        t -= 1
    return 1


# --------------------------------------------------------------------------
# Hoisted input projection:  (T*B, D) @ (D, 4H) + bias  ->  gate pre-activations
# One big MXU-friendly matmul instead of T tiny per-step matmuls.
# --------------------------------------------------------------------------
def _proj_kernel(x_ref, w_ref, b_ref, o_ref):
    o_ref[...] = (
        jnp.dot(x_ref[...], w_ref[...], preferred_element_type=jnp.float32)
        + b_ref[...]
    ).astype(o_ref.dtype)


def lstm_input_projection(x_tbd, wih_t, bias, *, tm_target=256, tn_target=256):
    """x_tbd: (T, B, D).  wih_t: (D, 4H) bf16.  bias: (1, 4H) f32 (= b_ih + b_hh).
    Returns gate pre-activations (T, B, 4H) in f32."""
    T, B, D = x_tbd.shape
    G = wih_t.shape[1]                                   # 4H
    M = T * B
    x2d = x_tbd.reshape(M, D).astype(wih_t.dtype)        # bf16 MXU input

    tm = _largest_aligned_tile(M, tm_target, 8)          # sublane-aligned M tile
    tn = _largest_aligned_tile(G, tn_target, 128)        # lane-aligned N tile

    out = pl.pallas_call(
        _proj_kernel,
        out_shape=jax.ShapeDtypeStruct((M, G), jnp.float32),
        grid_spec=pltpu.PrefetchScalarGridSpec(
            num_scalar_prefetch=0,
            grid=(M // tm, G // tn),
            in_specs=[
                pl.BlockSpec((tm, D), lambda i, j: (i, 0)),
                pl.BlockSpec((D, tn), lambda i, j: (0, j)),
                pl.BlockSpec((1, tn), lambda i, j: (0, j)),
            ],
            out_specs=pl.BlockSpec((tm, tn), lambda i, j: (i, j)),
        ),
        compiler_params=pltpu.CompilerParams(
            dimension_semantics=("parallel", "parallel")),
    )(x2d, wih_t, bias)
    return out.reshape(T, B, G)


# --------------------------------------------------------------------------
# Recurrent kernel: time axis blocked (grid=(batch_blocks, T//TB)); per grid step an
# unrolled fori_loop runs TB LSTM steps using only the h @ W_hh matmul.
# Gate order follows PyTorch nn.LSTM: [i, f, g, o].
# --------------------------------------------------------------------------
def _lstm_recurrent_kernel(write_seq, xg_ref, whh_ref, *refs):
    if write_seq:
        hseq_ref, hlast_ref, h_sc, c_sc = refs
    else:
        hlast_ref, h_sc, c_sc = refs
        hseq_ref = None

    t_blk = pl.program_id(1)

    @pl.when(t_blk == 0)
    def _():
        h_sc[...] = jnp.zeros_like(h_sc)
        c_sc[...] = jnp.zeros_like(c_sc)

    TB = xg_ref.shape[0]
    H = h_sc.shape[-1]
    whh = whh_ref[...]                                   # hoisted: constant across time loop

    def step(t, carry):
        h, c = carry                                     # f32 (BB, H)
        gates = xg_ref[t] + jnp.dot(                     # (BB, 4H) f32
            h.astype(whh.dtype), whh,
            preferred_element_type=jnp.float32)
        # NOTE: for production H should be a multiple of 128 so each gate slice is lane-aligned.
        i_g = jax.nn.sigmoid(gates[:, 0:H])
        f_g = jax.nn.sigmoid(gates[:, H:2 * H])
        g_g = jnp.tanh(gates[:, 2 * H:3 * H])
        o_g = jax.nn.sigmoid(gates[:, 3 * H:4 * H])
        c_new = f_g * c + i_g * g_g
        h_new = o_g * jnp.tanh(c_new)
        if write_seq:
            hseq_ref[t] = h_new.astype(hseq_ref.dtype)   # bf16 hidden sequence for next layer
        return h_new, c_new

    h_fin, c_fin = lax.fori_loop(0, TB, step, (h_sc[...], c_sc[...]), unroll=True)
    h_sc[...] = h_fin
    c_sc[...] = c_fin

    @pl.when(t_blk == pl.num_programs(1) - 1)
    def _():
        hlast_ref[...] = h_fin.astype(hlast_ref.dtype)   # written once, at the last time block


def lstm_recurrent(xg_tbg, whh_t, hid, *, time_block=16, batch_blocks=1, want_seq=True):
    """xg_tbg: (T, B, 4H) f32 pre-activations.  whh_t: (H, 4H) bf16.
    Returns (hseq (T, B, H) bf16 or None, h_last (B, H) f32)."""
    T, B, G = xg_tbg.shape
    assert G == 4 * hid
    assert B % batch_blocks == 0
    BB = B // batch_blocks
    TB = _largest_divisor(T, time_block)

    in_specs = [
        pl.BlockSpec((TB, BB, G), lambda b, t: (t, b, 0)),
        pl.BlockSpec((hid, G), lambda b, t: (0, 0)),
    ]
    scratch_shapes = [
        pltpu.VMEM((BB, hid), jnp.float32),   # h carry (f32)
        pltpu.VMEM((BB, hid), jnp.float32),   # c carry (f32)
    ]
    if want_seq:
        out_specs = [
            pl.BlockSpec((TB, BB, hid), lambda b, t: (t, b, 0)),
            pl.BlockSpec((BB, hid), lambda b, t: (b, 0)),
        ]
        out_shape = (
            jax.ShapeDtypeStruct((T, B, hid), jnp.bfloat16),
            jax.ShapeDtypeStruct((B, hid), jnp.float32),
        )
    else:
        out_specs = pl.BlockSpec((BB, hid), lambda b, t: (b, 0))
        out_shape = jax.ShapeDtypeStruct((B, hid), jnp.float32)

    grid_spec = pltpu.PrefetchScalarGridSpec(
        num_scalar_prefetch=0,
        grid=(batch_blocks, T // TB),
        in_specs=in_specs,
        out_specs=out_specs,
        scratch_shapes=scratch_shapes,
    )

    result = pl.pallas_call(
        functools.partial(_lstm_recurrent_kernel, want_seq),
        grid_spec=grid_spec,
        out_shape=out_shape,
        compiler_params=pltpu.CompilerParams(
            dimension_semantics=("parallel", "arbitrary")),
    )(xg_tbg, whh_t)

    if want_seq:
        hseq, hlast = result
        return hseq, hlast
    return None, result


# --------------------------------------------------------------------------
# Head: LayerNorm -> Linear(H, 2H) -> GELU(exact) -> [Dropout=id] -> Linear(2H, n_cls_padded)
# Output class dim is padded to 128 lanes (unmasked stores); sliced to n_cls outside.
# --------------------------------------------------------------------------
def _head_kernel(h_ref, gamma_ref, beta_ref, w1_ref, b1_ref, w2_ref, b2_ref, out_ref):
    h = h_ref[...].astype(jnp.float32)                   # (B, H)
    mean = jnp.mean(h, axis=-1, keepdims=True)
    var = jnp.mean(jnp.square(h - mean), axis=-1, keepdims=True)
    h_ln = (h - mean) * lax.rsqrt(var + 1e-5) * gamma_ref[...] + beta_ref[...]

    z1 = jnp.dot(h_ln, w1_ref[...], preferred_element_type=jnp.float32) + b1_ref[...]
    z1 = jax.nn.gelu(z1, approximate=False)              # nn.GELU default = exact (erf)
    # Dropout: eval mode -> identity.
    z2 = jnp.dot(z1, w2_ref[...], preferred_element_type=jnp.float32) + b2_ref[...]
    out_ref[...] = z2.astype(out_ref.dtype)


def head(h_last, hp):
    B, _ = h_last.shape
    n_pad = hp["w2_t"].shape[1]
    return pl.pallas_call(
        _head_kernel,
        out_shape=jax.ShapeDtypeStruct((B, n_pad), jnp.float32),
    )(h_last, hp["gamma"], hp["beta"], hp["w1_t"], hp["b1"], hp["w2_t"], hp["b2"])


# --------------------------------------------------------------------------
# Parameter preparation (done ONCE): transpose, cast to bf16, fold biases, pad head output.
# --------------------------------------------------------------------------
def prepare_params(params, n_cls):
    prep = {"lstm": [], "n_cls": n_cls}
    for p in params["lstm"]:
        prep["lstm"].append({
            "wih_t": jnp.transpose(p["w_ih"]).astype(jnp.bfloat16),          # (D, 4H)
            "whh_t": jnp.transpose(p["w_hh"]).astype(jnp.bfloat16),          # (H, 4H)
            "bias": (p["b_ih"] + p["b_hh"]).reshape(1, -1).astype(jnp.float32),
        })
    hp = params["head"]
    H = hp["gamma"].shape[0]
    n_pad = ((n_cls + 127) // 128) * 128
    w2t = jnp.transpose(hp["w2"]).astype(jnp.float32)                        # (2H, n_cls)
    w2t_pad = jnp.zeros((2 * H, n_pad), jnp.float32).at[:, :n_cls].set(w2t)
    b2_pad = jnp.zeros((1, n_pad), jnp.float32).at[:, :n_cls].set(
        hp["b2"].reshape(1, -1).astype(jnp.float32))
    prep["head"] = {
        "gamma": hp["gamma"].reshape(1, H).astype(jnp.float32),
        "beta": hp["beta"].reshape(1, H).astype(jnp.float32),
        "w1_t": jnp.transpose(hp["w1"]).astype(jnp.float32),                 # (H, 2H)
        "b1": hp["b1"].reshape(1, -1).astype(jnp.float32),
        "w2_t": w2t_pad,                                                     # (2H, n_pad)
        "b2": b2_pad,
    }
    return prep


# --------------------------------------------------------------------------
# Full model forward
# --------------------------------------------------------------------------
def lstm_classifier_forward(x_btd, prep, *, time_block=16, batch_blocks=1):
    """x_btd: (B, T, in_dim) batch_first, like PyTorch.  Returns (B, n_cls) logits."""
    x_tbd = jnp.transpose(x_btd, (1, 0, 2))              # time-major for the kernels
    h_in = x_tbd
    h_last = None
    n_layers = len(prep["lstm"])
    for li, layer_p in enumerate(prep["lstm"]):
        is_last = li == n_layers - 1
        hid = layer_p["whh_t"].shape[0]
        # Hoisted x @ W_ih^T + bias over all T*B rows (Pallas tiled matmul).
        xg = lstm_input_projection(h_in, layer_p["wih_t"], layer_p["bias"])
        # Sequential recurrence over blocked time axis.  Last layer skips the (T,B,H)
        # hidden-sequence writeback (head only needs h[-1]).
        h_seq, h_last = lstm_recurrent(xg, layer_p["whh_t"], hid,
                                       time_block=time_block,
                                       batch_blocks=batch_blocks,
                                       want_seq=not is_last)
        h_in = h_seq
        # inter-layer dropout: identity in eval mode
    logits_pad = head(h_last, prep["head"])
    return logits_pad[:, :prep["n_cls"]]


def init_params(key, in_dim, hid, layers, n_cls):
    params = {"lstm": [], "head": {}}
    k = 1.0 / jnp.sqrt(hid)
    for l in range(layers):
        d_in = in_dim if l == 0 else hid
        key, k1, k2, k3, k4 = jax.random.split(key, 5)
        params["lstm"].append({
            "w_ih": jax.random.uniform(k1, (4 * hid, d_in), jnp.float32, -k, k),
            "w_hh": jax.random.uniform(k2, (4 * hid, hid), jnp.float32, -k, k),
            "b_ih": jax.random.uniform(k3, (4 * hid,), jnp.float32, -k, k),
            "b_hh": jax.random.uniform(k4, (4 * hid,), jnp.float32, -k, k),
        })
    key, k1, k2, k3, k4 = jax.random.split(key, 5)
    kh = 1.0 / jnp.sqrt(hid)
    k2h = 1.0 / jnp.sqrt(2 * hid)
    params["head"] = {
        "gamma": jnp.ones((hid,), jnp.float32),
        "beta": jnp.zeros((hid,), jnp.float32),
        "w1": jax.random.uniform(k1, (2 * hid, hid), jnp.float32, -kh, kh),
        "b1": jax.random.uniform(k2, (2 * hid,), jnp.float32, -kh, kh),
        "w2": jax.random.uniform(k3, (n_cls, 2 * hid), jnp.float32, -k2h, k2h),
        "b2": jax.random.uniform(k4, (n_cls,), jnp.float32, -k2h, k2h),
    }
    return params


if __name__ == "__main__":
    B, T, IN_DIM, HID, LAYERS, N_CLS = 2, 8, 16, 32, 2, 5

    key = jax.random.PRNGKey(0)
    key, kx = jax.random.split(key)
    x = jax.random.normal(kx, (B, T, IN_DIM), jnp.float32)

    params = init_params(key, IN_DIM, HID, LAYERS, N_CLS)
    prep = prepare_params(params, N_CLS)

    # time_block=4 -> 2 time blocks in the grid (exercises the h/c carry across grid steps).
    # On v7x with a larger, sublane-aligned batch, set batch_blocks=2 to use both TensorCores.
    out = lstm_classifier_forward(x, prep, time_block=4, batch_blocks=1)
    out = jax.block_until_ready(out)
    assert out.shape == (B, N_CLS), out.shape
    assert bool(jnp.all(jnp.isfinite(out)))
    print("KERNEL_OK")
</pallas_src>

<mosaic_0001>
module attributes {stable_mosaic.version = 11 : i64} {
  func.func @_proj_kernel(%arg0: i32, %arg1: i32, %arg2: memref<16x16xbf16, #tpu.memory_space<vmem>>, %arg3: memref<16x128xbf16, #tpu.memory_space<vmem>>, %arg4: memref<1x128xf32, #tpu.memory_space<vmem>>, %arg5: memref<16x128xf32, #tpu.memory_space<vmem>>) attributes {dimension_semantics = [#tpu.dimension_semantics<parallel>, #tpu.dimension_semantics<parallel>], iteration_bounds = array<i64: 1, 1>, scalar_prefetch = 0 : i64, scratch_operands = 0 : i64, tpu.core_type = #tpu.core_type<tc>, window_params = [{transform_indices = @transform_0, window_bounds = array<i64: 16, 16>}, {transform_indices = @transform_1, window_bounds = array<i64: 16, 128>}, {transform_indices = @transform_2, window_bounds = array<i64: 1, 128>}, {transform_indices = @transform_3, window_bounds = array<i64: 16, 128>}]} {
    %c0 = arith.constant 0 : index
    %c0_0 = arith.constant 0 : index
    %0 = vector.load %arg2[%c0, %c0_0] : memref<16x16xbf16, #tpu.memory_space<vmem>>, vector<16x16xbf16>
    %c0_1 = arith.constant 0 : index
    %c0_2 = arith.constant 0 : index
    %1 = vector.load %arg3[%c0_1, %c0_2] : memref<16x128xbf16, #tpu.memory_space<vmem>>, vector<16x128xbf16>
    %cst = arith.constant dense<0.000000e+00> : vector<16x128xf32>
    %2 = tpu.matmul %0, %1, %cst {dimension_numbers = #tpu.dot_dimension_numbers<[1], [0], [0], [1], [0, 0, 1, 1], [], []>} : vector<16x16xbf16>, vector<16x128xbf16>, vector<16x128xf32> -> vector<16x128xf32>
    %c0_3 = arith.constant 0 : index
    %c0_4 = arith.constant 0 : index
    %3 = vector.load %arg4[%c0_3, %c0_4] : memref<1x128xf32, #tpu.memory_space<vmem>>, vector<1x128xf32>
    %4 = vector.broadcast %3 : vector<1x128xf32> to vector<16x128xf32>
    %5 = arith.addf %2, %4 : vector<16x128xf32>
    %c0_5 = arith.constant 0 : index
    %c0_6 = arith.constant 0 : index
    %6 = vector.load %arg5[%c0_5, %c0_6] : memref<16x128xf32, #tpu.memory_space<vmem>>, vector<16x128xf32>
    tpu.vector_store %arg5[%c0_5, %c0_6], %5 {strides = array<i32>} : memref<16x128xf32, #tpu.memory_space<vmem>>, vector<16x128xf32>,
    return
  }
  func.func @transform_0(%arg0: i32, %arg1: i32) -> (i32, i32) {
    %c0_i32 = arith.constant 0 : i32
    %c0_i32_0 = arith.constant 0 : i32
    return %arg0, %c0_i32 : i32, i32
  }
  func.func @transform_1(%arg0: i32, %arg1: i32) -> (i32, i32) {
    %c0_i32 = arith.constant 0 : i32
    %c0_i32_0 = arith.constant 0 : i32
    return %c0_i32, %arg1 : i32, i32
  }
  func.func @transform_2(%arg0: i32, %arg1: i32) -> (i32, i32) {
    %c0_i32 = arith.constant 0 : i32
    %c0_i32_0 = arith.constant 0 : i32
    return %c0_i32, %arg1 : i32, i32
  }
  func.func @transform_3(%arg0: i32, %arg1: i32) -> (i32, i32) {
    %c0_i32 = arith.constant 0 : i32
    return %arg0, %arg1 : i32, i32
  }
}

</mosaic_0001>

<llo_original>
// kernel: tpu_custom_call.1
$region0: #{tpu_custom_call.1}
  #allocation0 [shape = 'u32[]', space=smem, size = 0x4, offset = 0x4, fixed_abs, tag = 'smem constant byte address 0x4 - core index']
  #allocation1 [shape = 'u32[144,128]{1,0:T(1,128)}', space=vmem, size = 0x12000, scoped, tag = 'internal scratch']
  %s0 = inlined_call_operand.hbm [shape: bf16[16,16], index: 0, kind: input, shape index: {}]
  %s1 = inlined_call_operand.hbm [shape: bf16[16,128], index: 1, kind: input, shape index: {}]
  %s2 = inlined_call_operand.vmem [shape: f32[1,128], index: 2, kind: input, shape index: {}]
  %s3 = inlined_call_operand.hbm [shape: f32[16,128], index: 3, kind: output, shape index: {}]
  %s4 = sld [smem:[#allocation0]]
  $region30: #{tpu_custom_call.1} parent=0
    _
  %s6 = ssub.s32 1, %s4
  %s7 = scalar_select 0, %s6, %s4
  $region1: #{tpu_custom_call.1} parent=0
    #allocation2 [shape = 'u8[4096]{0}', space=vmem, size = 0x1000, scoped, tag = 'input window, operand 0, single buffered']
    #allocation3 [shape = 's32[1]{0}', space=sflag, size = 0x4, scoped, tag = 'scoped memory for tpu_custom_call.1']
    #allocation4 [shape = 's32[1]{0}', space=sflag, size = 0x4, scoped, tag = 'scoped memory for tpu_custom_call.1']
    #allocation5 [shape = 'u8[4096]{0}', space=vmem, size = 0x1000, scoped, tag = 'input window, operand 1, single buffered']
    #allocation6 [shape = 's32[1]{0}', space=sflag, size = 0x4, scoped, tag = 'scoped memory for tpu_custom_call.1']
    #allocation7 [shape = 'u8[8192]{0}', space=vmem, size = 0x2000, scoped, tag = 'output window, operand 0, single buffered']
    %8 = vsyncpa [#allocation3], 0
    %9 = vsyncpa [#allocation6], 0
    %10 = vsyncpa [#allocation4], 0
    // Predicated region
    $region2: #{tpu_custom_call.1} parent=1 // pred_check
      _
    $region3: #{tpu_custom_call.1} parent=1 // pred_check_branch
      %12 = sbr.rel (0) target = $region5
    $region4: #{tpu_custom_call.1} parent=1 // pred_region
      %s14 = ssub.s32 128, 128
      %15 = vsyncadd [#allocation3], %s14
      %s16 = sshll.u32 [#allocation2], 4
      %s17 = int_to_ptr.vmem [resolvable:$true] %s16
      %22 = dma.hbm_to_vmem [thread:$0]  %s0, 128, %s17, [#allocation3], 64, 64, 4
    $region5: #{tpu_custom_call.1} parent=1 // pred_fallthru
      _
    // Predicated region
    $region6: #{tpu_custom_call.1} parent=1 // pred_check
      _
    $region7: #{tpu_custom_call.1} parent=1 // pred_check_branch
      %24 = sbr.rel (0) target = $region9
    $region8: #{tpu_custom_call.1} parent=1 // pred_region
      %s26 = ssub.s32 128, 128
      %27 = vsyncadd [#allocation6], %s26
      %s28 = sshll.u32 [#allocation5], 4
      %s29 = int_to_ptr.vmem [resolvable:$true] %s28
      %34 = dma.hbm_to_vmem [thread:$0]  %s1, 128, %s29, [#allocation6], 64, 64, 4
    $region9: #{tpu_custom_call.1} parent=1 // pred_fallthru
      _
    // Predicated region
    $region10: #{tpu_custom_call.1} parent=1 // pred_check
      _
    $region11: #{tpu_custom_call.1} parent=1 // pred_check_branch
      %36 = sbr.rel (0) target = $region13
    $region12: #{tpu_custom_call.1} parent=1 // pred_region
      _
    $region13: #{tpu_custom_call.1} parent=1 // pred_fallthru
      _
    // Predicated region
    $region14: #{tpu_custom_call.1} parent=1 // pred_check
      _
    $region15: #{tpu_custom_call.1} parent=1 // pred_check_branch
      %38 = sbr.rel (0) target = $region17
    $region16: #{tpu_custom_call.1} parent=1 // pred_region
      %39 = dma.done [#allocation3], 128
    $region17: #{tpu_custom_call.1} parent=1 // pred_fallthru
      _
    // Predicated region
    $region18: #{tpu_custom_call.1} parent=1 // pred_check
      _
    $region19: #{tpu_custom_call.1} parent=1 // pred_check_branch
      %41 = sbr.rel (0) target = $region21
    $region20: #{tpu_custom_call.1} parent=1 // pred_region
      %42 = dma.done [#allocation6], 128
    $region21: #{tpu_custom_call.1} parent=1 // pred_fallthru
      _
    %v44 = vld [vmem:[#allocation2] sm:$0xf]
    %v45 = vld [vmem:[#allocation2 + $0x4] sm:$0xf]
    %v46 = vld [vmem:[#allocation5] sm:$0xf]
    %v47 = vld [vmem:[#allocation5 + $0x4] sm:$0xf]
    %v48 = vld [vmem:[%s2] sm:$0x1]
    %v50 = vlaneseq
    %v51 = vshrl.u32 %v50, 7
    %v52 = vsub.s32 0, %v51
    %v53 = vrot.slane %v48, %v52
    %v57 = vunpack.c.l.b16 %v44
    %v58 = vunpack.c.l.b16 %v45
    %v59 = vpack.c.b16 %v58, %v57
    %v62 = vunpack.c.l.b16 %v46
    %v63 = vunpack.c.l.b16 %v47
    %v64 = vpack.c.b16 %v63, %v62
    %vm66 = vcmask 130048
    %v68 = vsel %vm66, %v59, 0
    %70 = vmatprep.subr.bf16.mxu0 0
    %71 = vmatpush1.bf16.msra.mxu0 %v64
    %72 = vmatprep.subr.bf16.mxu0 0
    %73 = vmatpush1.bf16.msra.mxu0 0
    %74 = vmatprep.subr.bf16.mxu0 0
    %75 = vmatpush1.bf16.msra.mxu0 0
    %76 = vmatprep.subr.bf16.mxu0 0
    %77 = vmatpush1.bf16.msra.mxu0 0
    %78 = vmatprep.subr.bf16.mxu0 0
    %79 = vmatpush1.bf16.msra.mxu0 0
    %80 = vmatprep.subr.bf16.mxu0 0
    %81 = vmatpush1.bf16.msra.mxu0 0
    %82 = vmatprep.subr.bf16.mxu0 0
    %83 = vmatpush1.bf16.msra.mxu0 0
    %84 = vmatprep.subr.bf16.mxu0 0
    %85 = vmatpush1.bf16.msra.mxu0 0
    %86 = vmatprep.subr.bf16.mxu0 0
    %87 = vmatpush1.bf16.msra.mxu0 0
    %88 = vmatprep.subr.bf16.mxu0 0
    %89 = vmatpush1.bf16.msra.mxu0 0
    %90 = vmatprep.subr.bf16.mxu0 0
    %91 = vmatpush1.bf16.msra.mxu0 0
    %92 = vmatprep.subr.bf16.mxu0 0
    %93 = vmatpush1.bf16.msra.mxu0 0
    %94 = vmatprep.subr.bf16.mxu0 0
    %95 = vmatpush1.bf16.msra.mxu0 0
    %96 = vmatprep.subr.bf16.mxu0 0
    %97 = vmatpush1.bf16.msra.mxu0 0
    %98 = vmatprep.subr.bf16.mxu0 0
    %99 = vmatpush1.bf16.msra.mxu0 0
    %100 = vmatprep.subr.bf16.mxu0 0
    %101 = vmatpush1.bf16.msra.mxu0 0
    %102 = vmatprep.mubr.bf16.mxu0 0
    %103 = vmatmul.mubr.bf16.gmra.mrb[0].mxu0 %v68
    %v104 = vpop.f32.mrb[0].mxu0
    %v105 = vadd.f32 %v53, %v104
    %v106 = vpop.f32.mrb[0].mxu0
    %v107 = vpop.f32.mrb[0].mxu0
    %v108 = vadd.f32 %v53, %v107
    %v109 = vpop.f32.mrb[0].mxu0
    %110 = vdwg.mxu0
    %111 = vst [vmem:[#allocation7] sm:$0xff] %v105
    %112 = vst [vmem:[#allocation7 + $0x8] sm:$0xff] %v108
    // Predicated region
    $region22: #{tpu_custom_call.1} parent=1 // pred_check
      _
    $region23: #{tpu_custom_call.1} parent=1 // pred_check_branch
      %114 = sbr.rel (0) target = $region25
    $region24: #{tpu_custom_call.1} parent=1 // pred_region
      %s116 = ssub.s32 256, 256
      %117 = vsyncadd [#allocation4], %s116
      %s118 = sshll.u32 [#allocation7], 4
      %s119 = int_to_ptr.vmem [resolvable:$true] %s118
      %124 = dma.vmem_to_hbm [thread:$0]  %s119, 256, %s3, [#allocation4], 128, 128, 8
    $region25: #{tpu_custom_call.1} parent=1 // pred_fallthru
      _
    // Predicated region
    $region26: #{tpu_custom_call.1} parent=1 // pred_check
      _
    $region27: #{tpu_custom_call.1} parent=1 // pred_check_branch
      %126 = sbr.rel (0) target = $region29
    $region28: #{tpu_custom_call.1} parent=1 // pred_region
      %127 = dma.done [#allocation4], 256
    $region29: #{tpu_custom_call.1} parent=1 // pred_fallthru
      _
    %128 = vsyncpa [#allocation3], 1
    %129 = vsyncpa [#allocation6], 1
    %130 = vsyncpa [#allocation4], 1

</llo_original>
